<compile_context>
chip_gen: v7x
topology: tpu7x:2x2x1
jax: 0.10.0
libtpu: 0.0.40
codegen_flags: <defaults>
</compile_context>

<pallas_src>
import functools

import jax
import jax.numpy as jnp
from jax import lax
from jax.experimental import pallas as pl
from jax.experimental.pallas import tpu as pltpu


def _round_up(x, m):
    return (x + m - 1) // m * m


def _sigmoid(x):
    return 1.0 / (1.0 + jnp.exp(-x))


# ----------------------------------------------------------------------------
# Encoder linear: y = relu(x @ w + b), tiled over rows (parallel grid axis)
# ----------------------------------------------------------------------------
def _linear_kernel(x_ref, w_ref, b_ref, o_ref, *, relu):
    acc = jnp.dot(x_ref[...], w_ref[...], preferred_element_type=jnp.float32)
    acc = acc + b_ref[...]
    if relu:
        acc = jnp.maximum(acc, 0.0)
    o_ref[...] = acc.astype(o_ref.dtype)


def linear(x, w, b, relu=False, block_m=512):
    """y = x @ w + b (optionally ReLU).  Rows are tiled; K/N kept whole."""
    M, K = x.shape
    K2, N = w.shape
    assert K == K2
    if M > block_m:
        tm = block_m
        Mp = _round_up(M, tm)
    else:
        tm = M
        Mp = M
    if Mp != M:
        x = jnp.pad(x, ((0, Mp - M), (0, 0)))
    out = pl.pallas_call(
        functools.partial(_linear_kernel, relu=relu),
        out_shape=jax.ShapeDtypeStruct((Mp, N), jnp.float32),
        grid=(Mp // tm,),
        in_specs=[
            pl.BlockSpec((tm, K), lambda i: (i, 0)),
            pl.BlockSpec((K, N), lambda i: (0, 0)),
            pl.BlockSpec((1, N), lambda i: (0, 0)),
        ],
        out_specs=pl.BlockSpec((tm, N), lambda i: (i, 0)),
        compiler_params=pltpu.CompilerParams(
            dimension_semantics=("parallel",)),
    )(x, w, b)
    return out[:M] if Mp != M else out


# ----------------------------------------------------------------------------
# Fused masked-LSTM recurrence + policy/value heads (single grid step)
# ----------------------------------------------------------------------------
def _lstm_heads_kernel(enc_ref, ar_ref, done_ref,
                       wie_ref, wia_ref, whh_ref, b_ref,
                       h0_ref, c0_ref, wh_ref, bh_ref,
                       out_ref, hN_ref, cN_ref,
                       xg0_sc, xg1_sc, xg2_sc, xg3_sc, *, A):
    T, Np, D = enc_ref.shape
    A1 = ar_ref.shape[-1]
    C = whh_ref.shape[-1]
    LANES = wh_ref.shape[-1]

    # Pre-compute the input-gate contributions for ALL timesteps with one big
    # (T*Np)-row matmul per gate (better MXU utilisation than per-step 8-row
    # dots).  Bias (= b_ih + b_hh when porting from PyTorch) folded in here.
    X = enc_ref[...].reshape(T * Np, D)
    R = ar_ref[...].reshape(T * Np, A1)
    xg_refs = (xg0_sc, xg1_sc, xg2_sc, xg3_sc)
    for g in range(4):
        xg = (jnp.dot(X, wie_ref[g], preferred_element_type=jnp.float32)
              + jnp.dot(R, wia_ref[g], preferred_element_type=jnp.float32)
              + b_ref[g])
        xg_refs[g][...] = xg.reshape(T, Np, C)

    # Hoist loop-invariant weights out of the recurrence.
    whh = [whh_ref[g] for g in range(4)]
    w_head = wh_ref[...]                               # (C, LANES)
    b_head = bh_ref[...]                               # (1, LANES)
    col = lax.broadcasted_iota(jnp.int32, (Np, LANES), 1)
    is_pol = col < A

    def step(t, carry):
        h, c = carry
        # UNREAL done-masking: reset hidden state for envs whose episode just
        # ended, before consuming x[t]  (hidden * (1 - done[t])).
        mask = 1.0 - done_ref[t]                       # (Np, 1)
        h = h * mask
        c = c * mask

        g_i = xg0_sc[t] + jnp.dot(h, whh[0], preferred_element_type=jnp.float32)
        g_f = xg1_sc[t] + jnp.dot(h, whh[1], preferred_element_type=jnp.float32)
        g_g = xg2_sc[t] + jnp.dot(h, whh[2], preferred_element_type=jnp.float32)
        g_o = xg3_sc[t] + jnp.dot(h, whh[3], preferred_element_type=jnp.float32)

        i_t = _sigmoid(g_i)
        f_t = _sigmoid(g_f)
        gg_t = jnp.tanh(g_g)
        o_t = _sigmoid(g_o)

        c_new = f_t * c + i_t * gg_t
        h_new = o_t * jnp.tanh(c_new)

        # Heads: one lane-dense dot -> cols [0:A) = policy logits, col A =
        # value, rest zero.  Masked softmax over the policy columns only.
        head = jnp.dot(h_new, w_head, preferred_element_type=jnp.float32) + b_head
        m = jnp.max(jnp.where(is_pol, head, -3.0e38), axis=-1, keepdims=True)
        e = jnp.exp(jnp.where(is_pol, head - m, -3.0e38))
        s = jnp.sum(e, axis=-1, keepdims=True)
        probs = e / s                                   # exact (test tol 1e-5)
        packed = jnp.where(col == A, head, probs)       # value back in col A
        out_ref[t] = packed.astype(out_ref.dtype)       # full-lane (Np,128) store

        return h_new, c_new

    h_fin, c_fin = lax.fori_loop(0, T, step, (h0_ref[...], c0_ref[...]),
                                 unroll=True)
    hN_ref[...] = h_fin.astype(hN_ref.dtype)
    cN_ref[...] = c_fin.astype(cN_ref.dtype)


def lstm_with_heads(enc, ar, done, w_ih_enc, w_ih_ar, w_hh, b, h0, c0,
                    w_head, b_head, action_size):
    """enc: (T, Np, D), ar: (T, Np, A+1), done: (T, Np, 1); Np % 8 == 0."""
    T, Np, D = enc.shape
    A1 = ar.shape[-1]
    C = w_hh.shape[-1]
    LANES = w_head.shape[-1]
    kern = functools.partial(_lstm_heads_kernel, A=action_size)
    return pl.pallas_call(
        kern,
        out_shape=(
            jax.ShapeDtypeStruct((T, Np, LANES), jnp.float32),
            jax.ShapeDtypeStruct((Np, C), jnp.float32),
            jax.ShapeDtypeStruct((Np, C), jnp.float32),
        ),
        grid=(1,),
        in_specs=[
            pl.BlockSpec((T, Np, D), lambda i: (0, 0, 0)),
            pl.BlockSpec((T, Np, A1), lambda i: (0, 0, 0)),
            pl.BlockSpec((T, Np, 1), lambda i: (0, 0, 0)),
            pl.BlockSpec((4, D, C), lambda i: (0, 0, 0)),
            pl.BlockSpec((4, A1, C), lambda i: (0, 0, 0)),
            pl.BlockSpec((4, C, C), lambda i: (0, 0, 0)),
            pl.BlockSpec((4, 1, C), lambda i: (0, 0, 0)),
            pl.BlockSpec((Np, C), lambda i: (0, 0)),
            pl.BlockSpec((Np, C), lambda i: (0, 0)),
            pl.BlockSpec((C, LANES), lambda i: (0, 0)),
            pl.BlockSpec((1, LANES), lambda i: (0, 0)),
        ],
        out_specs=(
            pl.BlockSpec((T, Np, LANES), lambda i: (0, 0, 0)),
            pl.BlockSpec((Np, C), lambda i: (0, 0)),
            pl.BlockSpec((Np, C), lambda i: (0, 0)),
        ),
        scratch_shapes=[pltpu.VMEM((T, Np, C), jnp.float32)] * 4,
        compiler_params=pltpu.CompilerParams(
            dimension_semantics=("arbitrary",)),
    )(enc, ar, done, w_ih_enc, w_ih_ar, w_hh, b, h0, c0, w_head, b_head)


# ----------------------------------------------------------------------------
# Plain-JAX glue: im2col for the conv encoder, parameter init, forward wrapper
# ----------------------------------------------------------------------------
_CONV_K, _CONV_S, _CONV_OUT = 4, 2, 16


def im2col(x, kh, kw, sh, sw):
    # x: (B, C, H, W) NCHW  ->  (B*Ho*Wo, C*kh*kw)
    B, C, H, W = x.shape
    Ho = (H - kh) // sh + 1
    Wo = (W - kw) // sw + 1
    patches = []
    for i in range(kh):
        for j in range(kw):
            patches.append(x[:, :, i:i + sh * Ho:sh, j:j + sw * Wo:sw])
    p = jnp.stack(patches, axis=2)                      # (B, C, kh*kw, Ho, Wo)
    p = p.transpose(0, 3, 4, 1, 2).reshape(B * Ho * Wo, C * kh * kw)
    return p, Ho, Wo


def init_params(key, in_ch, H, W, dense_size, action_size, cell_size):
    kh = kw = _CONV_K
    Ho = (H - kh) // _CONV_S + 1
    Wo = (W - kw) // _CONV_S + 1
    ks = jax.random.split(key, 7)
    s = 0.1
    f32, bf16 = jnp.float32, jnp.bfloat16
    a1 = action_size + 1
    # LSTM weights stored gate-major (i, f, g, o) and pre-transposed for x @ w.
    # When porting from PyTorch: w_ih.T split into (enc, action_reward) halves,
    # and lstm_b = b_ih + b_hh.
    return dict(
        conv_w=(jax.random.normal(ks[0], (in_ch * kh * kw, _CONV_OUT), f32) * s
                ).astype(bf16),
        conv_b=jnp.zeros((1, _CONV_OUT), f32),
        fc_w=(jax.random.normal(ks[1], (Ho * Wo * _CONV_OUT, dense_size), f32) * s
              ).astype(bf16),
        fc_b=jnp.zeros((1, dense_size), f32),
        w_ih_enc=(jax.random.normal(ks[2], (4, dense_size, cell_size), f32) * s),
        w_ih_ar=(jax.random.normal(ks[3], (4, a1, cell_size), f32) * s),
        w_hh=(jax.random.normal(ks[4], (4, cell_size, cell_size), f32) * s),
        lstm_b=jnp.zeros((4, 1, cell_size), f32),
        wp=(jax.random.normal(ks[5], (cell_size, action_size), f32) * s),
        bp=jnp.zeros((1, action_size), f32),
        wv=(jax.random.normal(ks[6], (cell_size, 1), f32) * s),
        bv=jnp.zeros((1, 1), f32),
    )


def unreal_forward(params, state, action_reward, hidden=None, done=None):
    """Mirrors Unreal_ActorCritic_LSTM.forward.

    state:         (T, num_envs, C, H, W) float32
    action_reward: (T*num_envs, action_size + 1) float32
    hidden:        optional ((1, num_envs, cell), (1, num_envs, cell))
    done:          optional (T, num_envs) float32
    returns (policy (T*N, A), value (T*N,), (h_n, c_n) each (1, N, cell))
    """
    T, N, C, H, W = state.shape
    cell = params['w_hh'].shape[-1]
    A = params['wp'].shape[1]
    A1 = A + 1
    assert A1 <= 128, "pack width assumes action_size + 1 <= 128"
    LANES = 128

    # ---- encoder (model): conv + relu -> flatten -> dense + relu (bf16 MXU)
    x = state.reshape(T * N, C, H, W)
    patches, Ho, Wo = im2col(x, _CONV_K, _CONV_K, _CONV_S, _CONV_S)
    conv = linear(patches.astype(jnp.bfloat16), params['conv_w'],
                  params['conv_b'], relu=True)
    conv = conv.reshape(T * N, Ho * Wo * _CONV_OUT).astype(jnp.bfloat16)
    enc = linear(conv, params['fc_w'], params['fc_b'], relu=True)  # (T*N, D) f32

    # ---- pad envs to a multiple of 8 sublanes; concat is fused in-kernel
    Np = max(8, _round_up(N, 8))
    enc3 = enc.reshape(T, N, -1)
    ar3 = action_reward.reshape(T, N, A1).astype(jnp.float32)
    if Np != N:
        enc3 = jnp.pad(enc3, ((0, 0), (0, Np - N), (0, 0)))
        ar3 = jnp.pad(ar3, ((0, 0), (0, Np - N), (0, 0)))

    if hidden is None:
        h0 = jnp.zeros((Np, cell), jnp.float32)
        c0 = jnp.zeros((Np, cell), jnp.float32)
    else:
        h0 = hidden[0].reshape(N, cell).astype(jnp.float32)
        c0 = hidden[1].reshape(N, cell).astype(jnp.float32)
        if Np != N:
            h0 = jnp.pad(h0, ((0, Np - N), (0, 0)))
            c0 = jnp.pad(c0, ((0, Np - N), (0, 0)))

    if done is None:
        done3 = jnp.zeros((T, Np, 1), jnp.float32)
    else:
        done3 = done.reshape(T, N, 1).astype(jnp.float32)
        if Np != N:
            done3 = jnp.pad(done3, ((0, 0), (0, Np - N), (0, 0)))

    # ---- pack policy + value heads into one lane-dense (cell, 128) weight
    w_head = jnp.zeros((cell, LANES), jnp.float32)
    w_head = w_head.at[:, :A].set(params['wp'])
    w_head = w_head.at[:, A].set(params['wv'][:, 0])
    b_head = jnp.zeros((1, LANES), jnp.float32)
    b_head = b_head.at[:, :A].set(params['bp'])
    b_head = b_head.at[0, A].set(params['bv'][0, 0])

    out, hN, cN = lstm_with_heads(
        enc3, ar3, done3, params['w_ih_enc'], params['w_ih_ar'],
        params['w_hh'], params['lstm_b'], h0, c0, w_head, b_head, A)

    policy = out[:, :N, :A].reshape(T * N, A)
    value = out[:, :N, A].reshape(-1)
    hidden_out = (hN[:N][None], cN[:N][None])
    return policy, value, hidden_out


if __name__ == "__main__":
    key = jax.random.PRNGKey(0)
    T, N = 8, 2                       # seq length, num_envs
    C, H, W = 4, 16, 16               # NCHW frame
    action_size = 4
    cell_size = 32
    dense_size = 32

    kp, ks, ka, kd = jax.random.split(key, 4)
    params = init_params(kp, C, H, W, dense_size, action_size, cell_size)

    state = jax.random.normal(ks, (T, N, C, H, W), dtype=jnp.float32)
    action_reward = jax.random.normal(ka, (T * N, action_size + 1),
                                      dtype=jnp.float32)
    done = (jax.random.uniform(kd, (T, N)) < 0.2).astype(jnp.float32)
    hidden = (jnp.zeros((1, N, cell_size), jnp.float32),
              jnp.zeros((1, N, cell_size), jnp.float32))

    policy, value, hidden_out = unreal_forward(params, state, action_reward,
                                               hidden=hidden, done=done)
    jax.block_until_ready((policy, value, hidden_out))

    assert policy.shape == (T * N, action_size)
    assert value.shape == (T * N,)
    assert hidden_out[0].shape == (1, N, cell_size)
    assert hidden_out[1].shape == (1, N, cell_size)
    # policy rows must sum to 1 (softmax)
    assert jnp.allclose(jnp.sum(policy, axis=-1), 1.0, atol=1e-5)
    print("KERNEL_OK")
</pallas_src>

<mosaic_0001>
module attributes {stable_mosaic.version = 11 : i64} {
  func.func @_linear_kernel(%arg0: i32, %arg1: memref<512x64xbf16, #tpu.memory_space<vmem>>, %arg2: memref<64x16xbf16, #tpu.memory_space<vmem>>, %arg3: memref<1x16xf32, #tpu.memory_space<vmem>>, %arg4: memref<512x16xf32, #tpu.memory_space<vmem>>) attributes {dimension_semantics = [#tpu.dimension_semantics<parallel>], iteration_bounds = array<i64: 2>, scalar_prefetch = 0 : i64, scratch_operands = 0 : i64, tpu.core_type = #tpu.core_type<tc>, window_params = [{transform_indices = @transform_0, window_bounds = array<i64: 512, 64>}, {pipeline_mode = #tpu.pipeline_mode<synchronous>, transform_indices = @transform_1, window_bounds = array<i64: 64, 16>}, {pipeline_mode = #tpu.pipeline_mode<synchronous>, transform_indices = @transform_2, window_bounds = array<i64: 1, 16>}, {transform_indices = @transform_3, window_bounds = array<i64: 512, 16>}]} {
    %c0 = arith.constant 0 : index
    %c0_0 = arith.constant 0 : index
    %0 = vector.load %arg1[%c0, %c0_0] : memref<512x64xbf16, #tpu.memory_space<vmem>>, vector<512x64xbf16>
    %c0_1 = arith.constant 0 : index
    %c0_2 = arith.constant 0 : index
    %1 = vector.load %arg2[%c0_1, %c0_2] : memref<64x16xbf16, #tpu.memory_space<vmem>>, vector<64x16xbf16>
    %cst = arith.constant dense<0.000000e+00> : vector<512x16xf32>
    %2 = tpu.matmul %0, %1, %cst {dimension_numbers = #tpu.dot_dimension_numbers<[1], [0], [0], [1], [0, 0, 1, 1], [], []>} : vector<512x64xbf16>, vector<64x16xbf16>, vector<512x16xf32> -> vector<512x16xf32>
    %c0_3 = arith.constant 0 : index
    %c0_4 = arith.constant 0 : index
    %3 = vector.load %arg3[%c0_3, %c0_4] : memref<1x16xf32, #tpu.memory_space<vmem>>, vector<1x16xf32>
    %4 = vector.broadcast %3 : vector<1x16xf32> to vector<512x16xf32>
    %5 = arith.addf %2, %4 : vector<512x16xf32>
    %cst_5 = arith.constant 0.000000e+00 : f32
    %6 = vector.broadcast %cst_5 : f32 to vector<512x16xf32>
    %7 = arith.maximumf %5, %6 : vector<512x16xf32>
    %c0_6 = arith.constant 0 : index
    %c0_7 = arith.constant 0 : index
    %8 = vector.load %arg4[%c0_6, %c0_7] : memref<512x16xf32, #tpu.memory_space<vmem>>, vector<512x16xf32>
    tpu.vector_store %arg4[%c0_6, %c0_7], %7 {strides = array<i32>} : memref<512x16xf32, #tpu.memory_space<vmem>>, vector<512x16xf32>,
    return
  }
  func.func @transform_0(%arg0: i32) -> (i32, i32) {
    %c0_i32 = arith.constant 0 : i32
    %c0_i32_0 = arith.constant 0 : i32
    return %arg0, %c0_i32 : i32, i32
  }
  func.func @transform_1(%arg0: i32) -> (i32, i32) {
    %c0_i32 = arith.constant 0 : i32
    %c0_i32_0 = arith.constant 0 : i32
    %c0_i32_1 = arith.constant 0 : i32
    return %c0_i32, %c0_i32_0 : i32, i32
  }
  func.func @transform_2(%arg0: i32) -> (i32, i32) {
    %c0_i32 = arith.constant 0 : i32
    %c0_i32_0 = arith.constant 0 : i32
    %c0_i32_1 = arith.constant 0 : i32
    return %c0_i32, %c0_i32_0 : i32, i32
  }
  func.func @transform_3(%arg0: i32) -> (i32, i32) {
    %c0_i32 = arith.constant 0 : i32
    %c0_i32_0 = arith.constant 0 : i32
    return %arg0, %c0_i32 : i32, i32
  }
}

</mosaic_0001>

<llo_original>
// kernel: tpu_custom_call.1
$region0: #{tpu_custom_call.1}
  #allocation0 [shape = 'u32[]', space=smem, size = 0x4, offset = 0x4, fixed_abs, tag = 'smem constant byte address 0x4 - core index']
  #allocation1 [shape = 'u32[144,128]{1,0:T(1,128)}', space=vmem, size = 0x12000, scoped, tag = 'internal scratch']
  %s0 = inlined_call_operand.vmem [shape: bf16[1024,64], index: 0, kind: input, shape index: {}]
  %s1 = inlined_call_operand.vmem [shape: bf16[64,16], index: 1, kind: input, shape index: {}]
  %s2 = inlined_call_operand.vmem [shape: f32[1,16], index: 2, kind: input, shape index: {}]
  %s3 = inlined_call_operand.vmem [shape: f32[1024,16], index: 3, kind: output, shape index: {}]
  %s4 = sld [smem:[#allocation0]]
  $region45: #{tpu_custom_call.1} parent=0
    _
  %s6 = ssub.s32 1, %s4
  %s7 = scalar_select 0, %s6, %s4
  loop: start=0, step=1, limit=4
  $region2: #{tpu_custom_call.1} parent=0 // loop_pre_header
    _
  $region3: #{tpu_custom_call.1} parent=0 // loop_header
    %s9 = sphi 0, %s13
    %p10 = scmp.ge.s32.totalorder %s9, 4
    %s19 = sphi 0, %s21
    %s22 = sphi 0, %s19
    %s23 = sphi 0, %s22
    %s39 = sphi 0, %s23
    %s43 = sphi 0, %s43
    %s45 = sphi 0, %s43
    %s46 = sphi 0, %s45
    %s60 = sphi 0, %s46
    %s64 = sphi 0, %s64
    %s66 = sphi 0, %s64
    %s67 = sphi 0, %s66
    %s81 = sphi 0, %s67
    %s87 = sphi 0, %s89
    %s90 = sphi 0, %s87
    %s91 = sphi 0, %s90
    %s107 = sphi 0, %s91
  $region4: #{tpu_custom_call.1} parent=0 // loop_header_branch
    %12 = sbr.rel (%p10) target = $region8
  $region5: #{tpu_custom_call.1} parent=0 // loop_body
    %s14 = ssub.s32 %s9, 1
    %s15 = ssub.s32 %s9, 2
    %s16 = sadd.s32 %s9, 1
    %s17 = ssub.s32 %s9, %s16
    %p18 = scmp.eq.s32.totalorder %s17, 0
    %s20 = sadd.s32 %s19, 1
    %s21 = scalar_select %p18, %s19, %s20
    %p24 = pneg %p18
    %p25 = scmp.eq.s32.totalorder %s9, 1
    %p26 = por %p24, %p25
    %p27 = scmp.ne.s32.totalorder %s19, %s22
    %p28 = scmp.eq.s32.totalorder %s9, 0
    %p29 = por %p27, %p28
    %p30 = scmp.ne.s32.totalorder %s19, %s22
    %p31 = scmp.eq.s32.totalorder %s14, 1
    %p32 = por %p30, %p31
    %p33 = scmp.ne.s32.totalorder %s22, %s23
    %p34 = scmp.eq.s32.totalorder %s14, 0
    %p35 = por %p33, %p34
    %p36 = scmp.ne.s32.totalorder %s22, %s23
    %p37 = scmp.eq.s32.totalorder %s15, 1
    %p38 = por %p36, %p37
    %p40 = scmp.ne.s32.totalorder %s23, %s39
    %p41 = scmp.eq.s32.totalorder %s15, 0
    %p42 = por %p40, %p41
    %s44 = sadd.s32 %s43, 1
    %p47 = scmp.eq.s32.totalorder %s9, 1
    %p48 = scmp.ne.s32.totalorder %s43, %s45
    %p49 = scmp.eq.s32.totalorder %s9, 0
    %p50 = por %p48, %p49
    %p51 = scmp.ne.s32.totalorder %s43, %s45
    %p52 = scmp.eq.s32.totalorder %s14, 1
    %p53 = por %p51, %p52
    %p54 = scmp.ne.s32.totalorder %s45, %s46
    %p55 = scmp.eq.s32.totalorder %s14, 0
    %p56 = por %p54, %p55
    %p57 = scmp.ne.s32.totalorder %s45, %s46
    %p58 = scmp.eq.s32.totalorder %s15, 1
    %p59 = por %p57, %p58
    %p61 = scmp.ne.s32.totalorder %s46, %s60
    %p62 = scmp.eq.s32.totalorder %s15, 0
    %p63 = por %p61, %p62
    %s65 = sadd.s32 %s64, 1
    %p68 = scmp.eq.s32.totalorder %s9, 1
    %p69 = scmp.ne.s32.totalorder %s64, %s66
    %p70 = scmp.eq.s32.totalorder %s9, 0
    %p71 = por %p69, %p70
    %p72 = scmp.ne.s32.totalorder %s64, %s66
    %p73 = scmp.eq.s32.totalorder %s14, 1
    %p74 = por %p72, %p73
    %p75 = scmp.ne.s32.totalorder %s66, %s67
    %p76 = scmp.eq.s32.totalorder %s14, 0
    %p77 = por %p75, %p76
    %p78 = scmp.ne.s32.totalorder %s66, %s67
    %p79 = scmp.eq.s32.totalorder %s15, 1
    %p80 = por %p78, %p79
    %p82 = scmp.ne.s32.totalorder %s67, %s81
    %p83 = scmp.eq.s32.totalorder %s15, 0
    %p84 = por %p82, %p83
    %s85 = ssub.s32 %s9, %s16
    %p86 = scmp.eq.s32.totalorder %s85, 0
    %s88 = sadd.s32 %s87, 1
    %s89 = scalar_select %p86, %s87, %s88
    %p92 = pneg %p86
    %p93 = scmp.eq.s32.totalorder %s9, 1
    %p94 = por %p92, %p93
    %p95 = scmp.ne.s32.totalorder %s87, %s90
    %p96 = scmp.eq.s32.totalorder %s9, 0
    %p97 = por %p95, %p96
    %p98 = scmp.ne.s32.totalorder %s87, %s90
    %p99 = scmp.eq.s32.totalorder %s14, 1
    %p100 = por %p98, %p99
    %p101 = scmp.ne.s32.totalorder %s90, %s91
    %p102 = scmp.eq.s32.totalorder %s14, 0
    %p103 = por %p101, %p102
    %p104 = scmp.ne.s32.totalorder %s90, %s91
    %p105 = scmp.eq.s32.totalorder %s15, 1
    %p106 = por %p104, %p105
    %p108 = scmp.ne.s32.totalorder %s91, %s107
    %p109 = scmp.eq.s32.totalorder %s15, 0
    %p110 = por %p108, %p109
    %p111 = scmp.le.s32.totalorder 1, %s9
    %p112 = scmp.lt.s32.totalorder %s9, 3
    %p113 = pnand %p111, %p112
    %p114 = pneg %p113
    // Predicated region
    $region9: #{tpu_custom_call.1} parent=5 // pred_check
      _
    $region10: #{tpu_custom_call.1} parent=5 // pred_check_branch
      %116 = sbr.rel (%p113) target = $region12
    $region11: #{tpu_custom_call.1} parent=5 // pred_region
      %s117 = ssub.s32 %s9, 1
      // Predicated region
      $region13: #{tpu_custom_call.1} parent=11 // pred_check
        %p118 = pneg %p56
      $region14: #{tpu_custom_call.1} parent=11 // pred_check_branch
        %120 = sbr.rel (%p118) target = $region16
      $region15: #{tpu_custom_call.1} parent=11 // pred_region
        _
      $region16: #{tpu_custom_call.1} parent=11 // pred_fallthru
        _
      // Predicated region
      $region17: #{tpu_custom_call.1} parent=11 // pred_check
        %p121 = pneg %p77
      $region18: #{tpu_custom_call.1} parent=11 // pred_check_branch
        %123 = sbr.rel (%p121) target = $region20
      $region19: #{tpu_custom_call.1} parent=11 // pred_region
        _
      $region20: #{tpu_custom_call.1} parent=11 // pred_fallthru
        _
    $region12: #{tpu_custom_call.1} parent=5 // pred_fallthru
      _
    %p124 = scmp.lt.s32.totalorder %s9, 2
    // Predicated region
    $region21: #{tpu_custom_call.1} parent=5 // pred_check
      %p125 = pneg %p124
    $region22: #{tpu_custom_call.1} parent=5 // pred_check_branch
      %127 = sbr.rel (%p125) target = $region24
    $region23: #{tpu_custom_call.1} parent=5 // pred_region
      // Predicated region
      $region25: #{tpu_custom_call.1} parent=23 // pred_check
        %p128 = pneg %p29
      $region26: #{tpu_custom_call.1} parent=23 // pred_check_branch
        %130 = sbr.rel (%p128) target = $region28
      $region27: #{tpu_custom_call.1} parent=23 // pred_region
        %s131 = smul.u32 64, %s9
        %p132 = scmp.lt.s32.totalorder %s131, 127
        %s133 = scalar_select %p132, %s131, 127
        %s134 = smul.addr %s133, 4
        %s135 = scalar_lea.vmem %s0, %s134
        %s136 = smul.u32 64, %s9
      $region28: #{tpu_custom_call.1} parent=23 // pred_fallthru
        _
    $region24: #{tpu_custom_call.1} parent=5 // pred_fallthru
      _
    %p137 = scmp.le.s32.totalorder 1, %s9
    %p138 = scmp.lt.s32.totalorder %s9, 3
    %p139 = pnand %p137, %p138
    %p140 = pneg %p139
    // Predicated region
    $region29: #{tpu_custom_call.1} parent=5 // pred_check
      _
    $region30: #{tpu_custom_call.1} parent=5 // pred_check_branch
      %142 = sbr.rel (%p139) target = $region32
    $region31: #{tpu_custom_call.1} parent=5 // pred_region
      %s143 = ssub.s32 %s9, 1
      %s144 = smul.u32 64, %s14
      %p145 = scmp.lt.s32.totalorder %s144, 127
      %s146 = scalar_select %p145, %s144, 127
      %s147 = smul.addr %s146, 4
      %s148 = scalar_lea.vmem %s0, %s147
      %p149 = pneg %p35
      %p150 = pneg %p32
      %p151 = pneg %p56
      %p152 = pneg %p53
      %p153 = pneg %p77
      %p154 = pneg %p74
      %p155 = pneg %p103
      %p156 = pneg %p100
      %s157 = smul.u32 64, %s14
      %p158 = scmp.lt.s32.totalorder %s157, 127
      %s159 = scalar_select %p158, %s157, 127
      %s160 = smul.addr %s159, 8
      %s161 = scalar_lea.vmem %s3, %s160
      %s162 = smul.u32 64, %s14
      %p163 = scmp.lt.s32.totalorder %s162, 127
      %s164 = scalar_select %p163, %s162, 127
      %s165 = smul.addr %s164, 4
      %s166 = scalar_lea.vmem %s0, %s165
      %s167 = smul.u32 64, %s14
      %s168 = smul.u32 64, %s14
      %p169 = scmp.lt.s32.totalorder %s168, 127
      %s170 = scalar_select %p169, %s168, 127
      %s171 = smul.addr %s170, 8
      %s172 = scalar_lea.vmem %s3, %s171
      %s173 = smul.u32 64, %s14
      %v175 = vld [vmem:[%s166] sm:$0xf]
      %v176 = vld [vmem:[%s166 + $0x4] sm:$0xf]
      %v177 = vld [vmem:[%s166 + $0x8] sm:$0xf]
      %v178 = vld [vmem:[%s166 + $0xc] sm:$0xf]
      %v179 = vld [vmem:[%s166 + $0x10] sm:$0xf]
      %v180 = vld [vmem:[%s166 + $0x14] sm:$0xf]
      %v181 = vld [vmem:[%s166 + $0x18] sm:$0xf]
      %v182 = vld [vmem:[%s166 + $0x1c] sm:$0xf]
      %v183 = vld [vmem:[%s166 + $0x20] sm:$0xf]
      %v184 = vld [vmem:[%s166 + $0x24] sm:$0xf]
      %v185 = vld [vmem:[%s166 + $0x28] sm:$0xf]
      %v186 = vld [vmem:[%s166 + $0x2c] sm:$0xf]
      %v187 = vld [vmem:[%s166 + $0x30] sm:$0xf]
      %v188 = vld [vmem:[%s166 + $0x34] sm:$0xf]
      %v189 = vld [vmem:[%s166 + $0x38] sm:$0xf]
      %v190 = vld [vmem:[%s166 + $0x3c] sm:$0xf]
      %v191 = vld [vmem:[%s166 + $0x40] sm:$0xf]
      %v192 = vld [vmem:[%s166 + $0x44] sm:$0xf]
      %v193 = vld [vmem:[%s166 + $0x48] sm:$0xf]
      %v194 = vld [vmem:[%s166 + $0x4c] sm:$0xf]
      %v195 = vld [vmem:[%s166 + $0x50] sm:$0xf]
      %v196 = vld [vmem:[%s166 + $0x54] sm:$0xf]
      %v197 = vld [vmem:[%s166 + $0x58] sm:$0xf]
      %v198 = vld [vmem:[%s166 + $0x5c] sm:$0xf]
      %v199 = vld [vmem:[%s166 + $0x60] sm:$0xf]
      %v200 = vld [vmem:[%s166 + $0x64] sm:$0xf]
      %v201 = vld [vmem:[%s166 + $0x68] sm:$0xf]
      %v202 = vld [vmem:[%s166 + $0x6c] sm:$0xf]
      %v203 = vld [vmem:[%s166 + $0x70] sm:$0xf]
      %v204 = vld [vmem:[%s166 + $0x74] sm:$0xf]
      %v205 = vld [vmem:[%s166 + $0x78] sm:$0xf]
      %v206 = vld [vmem:[%s166 + $0x7c] sm:$0xf]
      %v207 = vld [vmem:[%s166 + $0x80] sm:$0xf]
      %v208 = vld [vmem:[%s166 + $0x84] sm:$0xf]
      %v209 = vld [vmem:[%s166 + $0x88] sm:$0xf]
      %v210 = vld [vmem:[%s166 + $0x8c] sm:$0xf]
      %v211 = vld [vmem:[%s166 + $0x90] sm:$0xf]
      %v212 = vld [vmem:[%s166 + $0x94] sm:$0xf]
      %v213 = vld [vmem:[%s166 + $0x98] sm:$0xf]
      %v214 = vld [vmem:[%s166 + $0x9c] sm:$0xf]
      %v215 = vld [vmem:[%s166 + $0xa0] sm:$0xf]
      %v216 = vld [vmem:[%s166 + $0xa4] sm:$0xf]
      %v217 = vld [vmem:[%s166 + $0xa8] sm:$0xf]
      %v218 = vld [vmem:[%s166 + $0xac] sm:$0xf]
      %v219 = vld [vmem:[%s166 + $0xb0] sm:$0xf]
      %v220 = vld [vmem:[%s166 + $0xb4] sm:$0xf]
      %v221 = vld [vmem:[%s166 + $0xb8] sm:$0xf]
      %v222 = vld [vmem:[%s166 + $0xbc] sm:$0xf]
      %v223 = vld [vmem:[%s166 + $0xc0] sm:$0xf]
      %v224 = vld [vmem:[%s166 + $0xc4] sm:$0xf]
      %v225 = vld [vmem:[%s166 + $0xc8] sm:$0xf]
      %v226 = vld [vmem:[%s166 + $0xcc] sm:$0xf]
      %v227 = vld [vmem:[%s166 + $0xd0] sm:$0xf]
      %v228 = vld [vmem:[%s166 + $0xd4] sm:$0xf]
      %v229 = vld [vmem:[%s166 + $0xd8] sm:$0xf]
      %v230 = vld [vmem:[%s166 + $0xdc] sm:$0xf]
      %v231 = vld [vmem:[%s166 + $0xe0] sm:$0xf]
      %v232 = vld [vmem:[%s166 + $0xe4] sm:$0xf]
      %v233 = vld [vmem:[%s166 + $0xe8] sm:$0xf]
      %v234 = vld [vmem:[%s166 + $0xec] sm:$0xf]
      %v235 = vld [vmem:[%s166 + $0xf0] sm:$0xf]
      %v236 = vld [vmem:[%s166 + $0xf4] sm:$0xf]
      %v237 = vld [vmem:[%s166 + $0xf8] sm:$0xf]
      %v238 = vld [vmem:[%s166 + $0xfc] sm:$0xf]
      %v239 = vld [vmem:[%s1] sm:$0xf]
      %v240 = vld [vmem:[%s1 + $0x4] sm:$0xf]
      %v241 = vld [vmem:[%s1 + $0x8] sm:$0xf]
      %v242 = vld [vmem:[%s1 + $0xc] sm:$0xf]
      %v243 = vld [vmem:[%s1 + $0x10] sm:$0xf]
      %v244 = vld [vmem:[%s1 + $0x14] sm:$0xf]
      %v245 = vld [vmem:[%s1 + $0x18] sm:$0xf]
      %v246 = vld [vmem:[%s1 + $0x1c] sm:$0xf]
      %v247 = vld [vmem:[%s2] sm:$0x1]
      %v249 = vlaneseq
      %v250 = vshrl.u32 %v249, 7
      %v251 = vsub.s32 0, %v250
      %v252 = vrot.slane %v247, %v251
      %v318 = vunpack.c.l.b16 %v175
      %v319 = vunpack.c.l.b16 %v176
      %v320 = vunpack.c.l.b16 %v177
      %v321 = vunpack.c.l.b16 %v178
      %v322 = vunpack.c.l.b16 %v179
      %v323 = vunpack.c.l.b16 %v180
      %v324 = vunpack.c.l.b16 %v181
      %v325 = vunpack.c.l.b16 %v182
      %v326 = vunpack.c.l.b16 %v183
      %v327 = vunpack.c.l.b16 %v184
      %v328 = vunpack.c.l.b16 %v185
      %v329 = vunpack.c.l.b16 %v186
      %v330 = vunpack.c.l.b16 %v187
      %v331 = vunpack.c.l.b16 %v188
      %v332 = vunpack.c.l.b16 %v189
      %v333 = vunpack.c.l.b16 %v190
      %v334 = vunpack.c.l.b16 %v191
      %v335 = vunpack.c.l.b16 %v192
      %v336 = vunpack.c.l.b16 %v193
      %v337 = vunpack.c.l.b16 %v194
      %v338 = vunpack.c.l.b16 %v195
      %v339 = vunpack.c.l.b16 %v196
      %v340 = vunpack.c.l.b16 %v197
      %v341 = vunpack.c.l.b16 %v198
      %v342 = vunpack.c.l.b16 %v199
      %v343 = vunpack.c.l.b16 %v200
      %v344 = vunpack.c.l.b16 %v201
      %v345 = vunpack.c.l.b16 %v202
      %v346 = vunpack.c.l.b16 %v203
      %v347 = vunpack.c.l.b16 %v204
      %v348 = vunpack.c.l.b16 %v205
      %v349 = vunpack.c.l.b16 %v206
      %v350 = vunpack.c.l.b16 %v207
      %v351 = vunpack.c.l.b16 %v208
      %v352 = vunpack.c.l.b16 %v209
      %v353 = vunpack.c.l.b16 %v210
      %v354 = vunpack.c.l.b16 %v211
      %v355 = vunpack.c.l.b16 %v212
      %v356 = vunpack.c.l.b16 %v213
      %v357 = vunpack.c.l.b16 %v214
      %v358 = vunpack.c.l.b16 %v215
      %v359 = vunpack.c.l.b16 %v216
      %v360 = vunpack.c.l.b16 %v217
      %v361 = vunpack.c.l.b16 %v218
      %v362 = vunpack.c.l.b16 %v219
      %v363 = vunpack.c.l.b16 %v220
      %v364 = vunpack.c.l.b16 %v221
      %v365 = vunpack.c.l.b16 %v222
      %v366 = vunpack.c.l.b16 %v223
      %v367 = vunpack.c.l.b16 %v224
      %v368 = vunpack.c.l.b16 %v225
      %v369 = vunpack.c.l.b16 %v226
      %v370 = vunpack.c.l.b16 %v227
      %v371 = vunpack.c.l.b16 %v228
      %v372 = vunpack.c.l.b16 %v229
      %v373 = vunpack.c.l.b16 %v230
      %v374 = vunpack.c.l.b16 %v231
      %v375 = vunpack.c.l.b16 %v232
      %v376 = vunpack.c.l.b16 %v233
      %v377 = vunpack.c.l.b16 %v234
      %v378 = vunpack.c.l.b16 %v235
      %v379 = vunpack.c.l.b16 %v236
      %v380 = vunpack.c.l.b16 %v237
      %v381 = vunpack.c.l.b16 %v238
      %v382 = vpack.c.b16 %v319, %v318
      %v383 = vpack.c.b16 %v321, %v320
      %v384 = vpack.c.b16 %v323, %v322
      %v385 = vpack.c.b16 %v325, %v324
      %v386 = vpack.c.b16 %v327, %v326
      %v387 = vpack.c.b16 %v329, %v328
      %v388 = vpack.c.b16 %v331, %v330
      %v389 = vpack.c.b16 %v333, %v332
      %v390 = vpack.c.b16 %v335, %v334
      %v391 = vpack.c.b16 %v337, %v336
      %v392 = vpack.c.b16 %v339, %v338
      %v393 = vpack.c.b16 %v341, %v340
      %v394 = vpack.c.b16 %v343, %v342
      %v395 = vpack.c.b16 %v345, %v344
      %v396 = vpack.c.b16 %v347, %v346
      %v397 = vpack.c.b16 %v349, %v348
      %v398 = vpack.c.b16 %v351, %v350
      %v399 = vpack.c.b16 %v353, %v352
      %v400 = vpack.c.b16 %v355, %v354
      %v401 = vpack.c.b16 %v357, %v356
      %v402 = vpack.c.b16 %v359, %v358
      %v403 = vpack.c.b16 %v361, %v360
      %v404 = vpack.c.b16 %v363, %v362
      %v405 = vpack.c.b16 %v365, %v364
      %v406 = vpack.c.b16 %v367, %v366
      %v407 = vpack.c.b16 %v369, %v368
      %v408 = vpack.c.b16 %v371, %v370
      %v409 = vpack.c.b16 %v373, %v372
      %v410 = vpack.c.b16 %v375, %v374
      %v411 = vpack.c.b16 %v377, %v376
      %v412 = vpack.c.b16 %v379, %v378
      %v413 = vpack.c.b16 %v381, %v380
      %v422 = vunpack.c.l.b16 %v239
      %v423 = vunpack.c.l.b16 %v240
      %v424 = vunpack.c.l.b16 %v241
      %v425 = vunpack.c.l.b16 %v242
      %v426 = vunpack.c.l.b16 %v243
      %v427 = vunpack.c.l.b16 %v244
      %v428 = vunpack.c.l.b16 %v245
      %v429 = vunpack.c.l.b16 %v246
      %v430 = vpack.c.b16 %v423, %v422
      %v431 = vpack.c.b16 %v425, %v424
      %v432 = vpack.c.b16 %v427, %v426
      %v433 = vpack.c.b16 %v429, %v428
      %vm438 = vcmask 523264
      %v440 = vsel %vm438, %v382, 0
      %v443 = vsel %vm438, %v383, 0
      %v446 = vsel %vm438, %v384, 0
      %v449 = vsel %vm438, %v385, 0
      %v452 = vsel %vm438, %v386, 0
      %v455 = vsel %vm438, %v387, 0
      %v458 = vsel %vm438, %v388, 0
      %v461 = vsel %vm438, %v389, 0
      %v464 = vsel %vm438, %v390, 0
      %v467 = vsel %vm438, %v391, 0
      %v470 = vsel %vm438, %v392, 0
      %v473 = vsel %vm438, %v393, 0
      %v476 = vsel %vm438, %v394, 0
      %v479 = vsel %vm438, %v395, 0
      %v482 = vsel %vm438, %v396, 0
      %v485 = vsel %vm438, %v397, 0
      %v488 = vsel %vm438, %v398, 0
      %v491 = vsel %vm438, %v399, 0
      %v494 = vsel %vm438, %v400, 0
      %v497 = vsel %vm438, %v401, 0
      %v500 = vsel %vm438, %v402, 0
      %v503 = vsel %vm438, %v403, 0
      %v506 = vsel %vm438, %v404, 0
      %v509 = vsel %vm438, %v405, 0
      %v512 = vsel %vm438, %v406, 0
      %v515 = vsel %vm438, %v407, 0
      %v518 = vsel %vm438, %v408, 0
      %v521 = vsel %vm438, %v409, 0
      %v524 = vsel %vm438, %v410, 0
      %v527 = vsel %vm438, %v411, 0
      %v530 = vsel %vm438, %v412, 0
      %v533 = vsel %vm438, %v413, 0
      %535 = vmatprep.subr.bf16.mxu0 0
      %536 = vmatpush1.bf16.msra.mxu0 %v430
      %537 = vmatprep.subr.bf16.mxu0 0
      %538 = vmatpush1.bf16.msra.mxu0 %v431
      %539 = vmatprep.subr.bf16.mxu0 0
      %540 = vmatpush1.bf16.msra.mxu0 %v432
      %541 = vmatprep.subr.bf16.mxu0 0
      %542 = vmatpush1.bf16.msra.mxu0 %v433
      %543 = vmatprep.subr.bf16.mxu0 0
      %544 = vmatpush1.bf16.msra.mxu0 0
      %545 = vmatprep.subr.bf16.mxu0 0
      %546 = vmatpush1.bf16.msra.mxu0 0
      %547 = vmatprep.subr.bf16.mxu0 0
      %548 = vmatpush1.bf16.msra.mxu0 0
      %549 = vmatprep.subr.bf16.mxu0 0
      %550 = vmatpush1.bf16.msra.mxu0 0
      %551 = vmatprep.subr.bf16.mxu0 0
      %552 = vmatpush1.bf16.msra.mxu0 0
      %553 = vmatprep.subr.bf16.mxu0 0
      %554 = vmatpush1.bf16.msra.mxu0 0
      %555 = vmatprep.subr.bf16.mxu0 0
      %556 = vmatpush1.bf16.msra.mxu0 0
      %557 = vmatprep.subr.bf16.mxu0 0
      %558 = vmatpush1.bf16.msra.mxu0 0
      %559 = vmatprep.subr.bf16.mxu0 0
      %560 = vmatpush1.bf16.msra.mxu0 0
      %561 = vmatprep.subr.bf16.mxu0 0
      %562 = vmatpush1.bf16.msra.mxu0 0
      %563 = vmatprep.subr.bf16.mxu0 0
      %564 = vmatpush1.bf16.msra.mxu0 0
      %565 = vmatprep.subr.bf16.mxu0 0
      %566 = vmatpush1.bf16.msra.mxu0 0
      %567 = vmatprep.mubr.bf16.mxu0 0
      %568 = vmatmul.mubr.bf16.gmra.mrb[0].mxu0 %v440
      %v569 = vpop.f32.mrb[0].mxu0
      %v570 = vadd.f32 %v252, %v569
      %v571 = vpop.f32.mrb[0].mxu0
      %v572 = vpop.f32.mrb[0].mxu0
      %v573 = vadd.f32 %v252, %v572
      %v574 = vpop.f32.mrb[0].mxu0
      %575 = vmatprep.mubr.bf16.mxu0 0
      %576 = vmatmul.mubr.bf16.gmra.mrb[0].mxu0 %v443
      %v577 = vpop.f32.mrb[0].mxu0
      %v578 = vadd.f32 %v252, %v577
      %v579 = vpop.f32.mrb[0].mxu0
      %v580 = vpop.f32.mrb[0].mxu0
      %v581 = vadd.f32 %v252, %v580
      %v582 = vpop.f32.mrb[0].mxu0
      %583 = vmatprep.mubr.bf16.mxu0 0
      %584 = vmatmul.mubr.bf16.gmra.mrb[0].mxu0 %v446
      %v585 = vpop.f32.mrb[0].mxu0
      %v586 = vadd.f32 %v252, %v585
      %v587 = vpop.f32.mrb[0].mxu0
      %v588 = vpop.f32.mrb[0].mxu0
      %v589 = vadd.f32 %v252, %v588
      %v590 = vpop.f32.mrb[0].mxu0
      %591 = vmatprep.mubr.bf16.mxu0 0
      %592 = vmatmul.mubr.bf16.gmra.mrb[0].mxu0 %v449
      %v593 = vpop.f32.mrb[0].mxu0
      %v594 = vadd.f32 %v252, %v593
      %v595 = vpop.f32.mrb[0].mxu0
      %v596 = vpop.f32.mrb[0].mxu0
      %v597 = vadd.f32 %v252, %v596
      %v598 = vpop.f32.mrb[0].mxu0
      %599 = vmatprep.mubr.bf16.mxu0 0
      %600 = vmatmul.mubr.bf16.gmra.mrb[0].mxu0 %v452
      %v601 = vpop.f32.mrb[0].mxu0
      %v602 = vadd.f32 %v252, %v601
      %v603 = vpop.f32.mrb[0].mxu0
      %v604 = vpop.f32.mrb[0].mxu0
      %v605 = vadd.f32 %v252, %v604
      %v606 = vpop.f32.mrb[0].mxu0
      %607 = vmatprep.mubr.bf16.mxu0 0
      %608 = vmatmul.mubr.bf16.gmra.mrb[0].mxu0 %v455
      %v609 = vpop.f32.mrb[0].mxu0
      %v610 = vadd.f32 %v252, %v609
      %v611 = vpop.f32.mrb[0].mxu0
      %v612 = vpop.f32.mrb[0].mxu0
      %v613 = vadd.f32 %v252, %v612
      %v614 = vpop.f32.mrb[0].mxu0
      %615 = vmatprep.mubr.bf16.mxu0 0
      %616 = vmatmul.mubr.bf16.gmra.mrb[0].mxu0 %v458
      %v617 = vpop.f32.mrb[0].mxu0
      %v618 = vadd.f32 %v252, %v617
      %v619 = vpop.f32.mrb[0].mxu0
      %v620 = vpop.f32.mrb[0].mxu0
      %v621 = vadd.f32 %v252, %v620
      %v622 = vpop.f32.mrb[0].mxu0
      %623 = vmatprep.mubr.bf16.mxu0 0
      %624 = vmatmul.mubr.bf16.gmra.mrb[0].mxu0 %v461
      %v625 = vpop.f32.mrb[0].mxu0
      %v626 = vadd.f32 %v252, %v625
      %v627 = vpop.f32.mrb[0].mxu0
      %v628 = vpop.f32.mrb[0].mxu0
      %v629 = vadd.f32 %v252, %v628
      %v630 = vpop.f32.mrb[0].mxu0
      %631 = vmatprep.mubr.bf16.mxu0 0
      %632 = vmatmul.mubr.bf16.gmra.mrb[0].mxu0 %v464
      %v633 = vpop.f32.mrb[0].mxu0
      %v634 = vadd.f32 %v252, %v633
      %v635 = vpop.f32.mrb[0].mxu0
      %v636 = vpop.f32.mrb[0].mxu0
      %v637 = vadd.f32 %v252, %v636
      %v638 = vpop.f32.mrb[0].mxu0
      %639 = vmatprep.mubr.bf16.mxu0 0
      %640 = vmatmul.mubr.bf16.gmra.mrb[0].mxu0 %v467
      %v641 = vpop.f32.mrb[0].mxu0
      %v642 = vadd.f32 %v252, %v641
      %v643 = vpop.f32.mrb[0].mxu0
      %v644 = vpop.f32.mrb[0].mxu0
      %v645 = vadd.f32 %v252, %v644
      %v646 = vpop.f32.mrb[0].mxu0
      %647 = vmatprep.mubr.bf16.mxu0 0
      %648 = vmatmul.mubr.bf16.gmra.mrb[0].mxu0 %v470
      %v649 = vpop.f32.mrb[0].mxu0
      %v650 = vadd.f32 %v252, %v649
      %v651 = vpop.f32.mrb[0].mxu0
      %v652 = vpop.f32.mrb[0].mxu0
      %v653 = vadd.f32 %v252, %v652
      %v654 = vpop.f32.mrb[0].mxu0
      %655 = vmatprep.mubr.bf16.mxu0 0
      %656 = vmatmul.mubr.bf16.gmra.mrb[0].mxu0 %v473
      %v657 = vpop.f32.mrb[0].mxu0
      %v658 = vadd.f32 %v252, %v657
      %v659 = vpop.f32.mrb[0].mxu0
      %v660 = vpop.f32.mrb[0].mxu0
      %v661 = vadd.f32 %v252, %v660
      %v662 = vpop.f32.mrb[0].mxu0
      %663 = vmatprep.mubr.bf16.mxu0 0
      %664 = vmatmul.mubr.bf16.gmra.mrb[0].mxu0 %v476
      %v665 = vpop.f32.mrb[0].mxu0
      %v666 = vadd.f32 %v252, %v665
      %v667 = vpop.f32.mrb[0].mxu0
      %v668 = vpop.f32.mrb[0].mxu0
      %v669 = vadd.f32 %v252, %v668
      %v670 = vpop.f32.mrb[0].mxu0
      %671 = vmatprep.mubr.bf16.mxu0 0
      %672 = vmatmul.mubr.bf16.gmra.mrb[0].mxu0 %v479
      %v673 = vpop.f32.mrb[0].mxu0
      %v674 = vadd.f32 %v252, %v673
      %v675 = vpop.f32.mrb[0].mxu0
      %v676 = vpop.f32.mrb[0].mxu0
      %v677 = vadd.f32 %v252, %v676
      %v678 = vpop.f32.mrb[0].mxu0
      %679 = vmatprep.mubr.bf16.mxu0 0
      %680 = vmatmul.mubr.bf16.gmra.mrb[0].mxu0 %v482
      %v681 = vpop.f32.mrb[0].mxu0
      %v682 = vadd.f32 %v252, %v681
      %v683 = vpop.f32.mrb[0].mxu0
      %v684 = vpop.f32.mrb[0].mxu0
      %v685 = vadd.f32 %v252, %v684
      %v686 = vpop.f32.mrb[0].mxu0
      %687 = vmatprep.mubr.bf16.mxu0 0
      %688 = vmatmul.mubr.bf16.gmra.mrb[0].mxu0 %v485
      %v689 = vpop.f32.mrb[0].mxu0
      %v690 = vadd.f32 %v252, %v689
      %v691 = vpop.f32.mrb[0].mxu0
      %v692 = vpop.f32.mrb[0].mxu0
      %v693 = vadd.f32 %v252, %v692
      %v694 = vpop.f32.mrb[0].mxu0
      %695 = vmatprep.mubr.bf16.mxu0 0
      %696 = vmatmul.mubr.bf16.gmra.mrb[0].mxu0 %v488
      %v697 = vpop.f32.mrb[0].mxu0
      %v698 = vadd.f32 %v252, %v697
      %v699 = vpop.f32.mrb[0].mxu0
      %v700 = vpop.f32.mrb[0].mxu0
      %v701 = vadd.f32 %v252, %v700
      %v702 = vpop.f32.mrb[0].mxu0
      %703 = vmatprep.mubr.bf16.mxu0 0
      %704 = vmatmul.mubr.bf16.gmra.mrb[0].mxu0 %v491
      %v705 = vpop.f32.mrb[0].mxu0
      %v706 = vadd.f32 %v252, %v705
      %v707 = vpop.f32.mrb[0].mxu0
      %v708 = vpop.f32.mrb[0].mxu0
      %v709 = vadd.f32 %v252, %v708
      %v710 = vpop.f32.mrb[0].mxu0
      %711 = vmatprep.mubr.bf16.mxu0 0
      %712 = vmatmul.mubr.bf16.gmra.mrb[0].mxu0 %v494
      %v713 = vpop.f32.mrb[0].mxu0
      %v714 = vadd.f32 %v252, %v713
      %v715 = vpop.f32.mrb[0].mxu0
      %v716 = vpop.f32.mrb[0].mxu0
      %v717 = vadd.f32 %v252, %v716
      %v718 = vpop.f32.mrb[0].mxu0
      %719 = vmatprep.mubr.bf16.mxu0 0
      %720 = vmatmul.mubr.bf16.gmra.mrb[0].mxu0 %v497
      %v721 = vpop.f32.mrb[0].mxu0
      %v722 = vadd.f32 %v252, %v721
      %v723 = vpop.f32.mrb[0].mxu0
      %v724 = vpop.f32.mrb[0].mxu0
      %v725 = vadd.f32 %v252, %v724
      %v726 = vpop.f32.mrb[0].mxu0
      %727 = vmatprep.mubr.bf16.mxu0 0
      %728 = vmatmul.mubr.bf16.gmra.mrb[0].mxu0 %v500
      %v729 = vpop.f32.mrb[0].mxu0
      %v730 = vadd.f32 %v252, %v729
      %v731 = vpop.f32.mrb[0].mxu0
      %v732 = vpop.f32.mrb[0].mxu0
      %v733 = vadd.f32 %v252, %v732
      %v734 = vpop.f32.mrb[0].mxu0
      %735 = vmatprep.mubr.bf16.mxu0 0
      %736 = vmatmul.mubr.bf16.gmra.mrb[0].mxu0 %v503
      %v737 = vpop.f32.mrb[0].mxu0
      %v738 = vadd.f32 %v252, %v737
      %v739 = vpop.f32.mrb[0].mxu0
      %v740 = vpop.f32.mrb[0].mxu0
      %v741 = vadd.f32 %v252, %v740
      %v742 = vpop.f32.mrb[0].mxu0
      %743 = vmatprep.mubr.bf16.mxu0 0
      %744 = vmatmul.mubr.bf16.gmra.mrb[0].mxu0 %v506
      %v745 = vpop.f32.mrb[0].mxu0
      %v746 = vadd.f32 %v252, %v745
      %v747 = vpop.f32.mrb[0].mxu0
      %v748 = vpop.f32.mrb[0].mxu0
      %v749 = vadd.f32 %v252, %v748
      %v750 = vpop.f32.mrb[0].mxu0
      %751 = vmatprep.mubr.bf16.mxu0 0
      %752 = vmatmul.mubr.bf16.gmra.mrb[0].mxu0 %v509
      %v753 = vpop.f32.mrb[0].mxu0
      %v754 = vadd.f32 %v252, %v753
      %v755 = vpop.f32.mrb[0].mxu0
      %v756 = vpop.f32.mrb[0].mxu0
      %v757 = vadd.f32 %v252, %v756
      %v758 = vpop.f32.mrb[0].mxu0
      %759 = vmatprep.mubr.bf16.mxu0 0
      %760 = vmatmul.mubr.bf16.gmra.mrb[0].mxu0 %v512
      %v761 = vpop.f32.mrb[0].mxu0
      %v762 = vadd.f32 %v252, %v761
      %v763 = vpop.f32.mrb[0].mxu0
      %v764 = vpop.f32.mrb[0].mxu0
      %v765 = vadd.f32 %v252, %v764
      %v766 = vpop.f32.mrb[0].mxu0
      %767 = vmatprep.mubr.bf16.mxu0 0
      %768 = vmatmul.mubr.bf16.gmra.mrb[0].mxu0 %v515
      %v769 = vpop.f32.mrb[0].mxu0
      %v770 = vadd.f32 %v252, %v769
      %v771 = vpop.f32.mrb[0].mxu0
      %v772 = vpop.f32.mrb[0].mxu0
      %v773 = vadd.f32 %v252, %v772
      %v774 = vpop.f32.mrb[0].mxu0
      %775 = vmatprep.mubr.bf16.mxu0 0
      %776 = vmatmul.mubr.bf16.gmra.mrb[0].mxu0 %v518
      %v777 = vpop.f32.mrb[0].mxu0
      %v778 = vadd.f32 %v252, %v777
      %v779 = vpop.f32.mrb[0].mxu0
      %v780 = vpop.f32.mrb[0].mxu0
      %v781 = vadd.f32 %v252, %v780
      %v782 = vpop.f32.mrb[0].mxu0
      %783 = vmatprep.mubr.bf16.mxu0 0
      %784 = vmatmul.mubr.bf16.gmra.mrb[0].mxu0 %v521
      %v785 = vpop.f32.mrb[0].mxu0
      %v786 = vadd.f32 %v252, %v785
      %v787 = vpop.f32.mrb[0].mxu0
      %v788 = vpop.f32.mrb[0].mxu0
      %v789 = vadd.f32 %v252, %v788
      %v790 = vpop.f32.mrb[0].mxu0
      %791 = vmatprep.mubr.bf16.mxu0 0
      %792 = vmatmul.mubr.bf16.gmra.mrb[0].mxu0 %v524
      %v793 = vpop.f32.mrb[0].mxu0
      %v794 = vadd.f32 %v252, %v793
      %v795 = vpop.f32.mrb[0].mxu0
      %v796 = vpop.f32.mrb[0].mxu0
      %v797 = vadd.f32 %v252, %v796
      %v798 = vpop.f32.mrb[0].mxu0
      %799 = vmatprep.mubr.bf16.mxu0 0
      %800 = vmatmul.mubr.bf16.gmra.mrb[0].mxu0 %v527
      %v801 = vpop.f32.mrb[0].mxu0
      %v802 = vadd.f32 %v252, %v801
      %v803 = vpop.f32.mrb[0].mxu0
      %v804 = vpop.f32.mrb[0].mxu0
      %v805 = vadd.f32 %v252, %v804
      %v806 = vpop.f32.mrb[0].mxu0
      %807 = vmatprep.mubr.bf16.mxu0 0
      %808 = vmatmul.mubr.bf16.gmra.mrb[0].mxu0 %v530
      %v809 = vpop.f32.mrb[0].mxu0
      %v810 = vadd.f32 %v252, %v809
      %v811 = vpop.f32.mrb[0].mxu0
      %v812 = vpop.f32.mrb[0].mxu0
      %v813 = vadd.f32 %v252, %v812
      %v814 = vpop.f32.mrb[0].mxu0
      %815 = vmatprep.mubr.bf16.mxu0 0
      %816 = vmatmul.mubr.bf16.gmra.mrb[0].mxu0 %v533
      %v817 = vpop.f32.mrb[0].mxu0
      %v818 = vadd.f32 %v252, %v817
      %v819 = vpop.f32.mrb[0].mxu0
      %v820 = vpop.f32.mrb[0].mxu0
      %v821 = vadd.f32 %v252, %v820
      %v822 = vpop.f32.mrb[0].mxu0
      %823 = vdwg.mxu0
      %v824 = vmax.f32 %v570, 0.0
      %v825 = vmax.f32 %v573, 0.0
      %v826 = vmax.f32 %v578, 0.0
      %v827 = vmax.f32 %v581, 0.0
      %v828 = vmax.f32 %v586, 0.0
      %v829 = vmax.f32 %v589, 0.0
      %v830 = vmax.f32 %v594, 0.0
      %v831 = vmax.f32 %v597, 0.0
      %v832 = vmax.f32 %v602, 0.0
      %v833 = vmax.f32 %v605, 0.0
      %v834 = vmax.f32 %v610, 0.0
      %v835 = vmax.f32 %v613, 0.0
      %v836 = vmax.f32 %v618, 0.0
      %v837 = vmax.f32 %v621, 0.0
      %v838 = vmax.f32 %v626, 0.0
      %v839 = vmax.f32 %v629, 0.0
      %v840 = vmax.f32 %v634, 0.0
      %v841 = vmax.f32 %v637, 0.0
      %v842 = vmax.f32 %v642, 0.0
      %v843 = vmax.f32 %v645, 0.0
      %v844 = vmax.f32 %v650, 0.0
      %v845 = vmax.f32 %v653, 0.0
      %v846 = vmax.f32 %v658, 0.0
      %v847 = vmax.f32 %v661, 0.0
      %v848 = vmax.f32 %v666, 0.0
      %v849 = vmax.f32 %v669, 0.0
      %v850 = vmax.f32 %v674, 0.0
      %v851 = vmax.f32 %v677, 0.0
      %v852 = vmax.f32 %v682, 0.0
      %v853 = vmax.f32 %v685, 0.0
      %v854 = vmax.f32 %v690, 0.0
      %v855 = vmax.f32 %v693, 0.0
      %v856 = vmax.f32 %v698, 0.0
      %v857 = vmax.f32 %v701, 0.0
      %v858 = vmax.f32 %v706, 0.0
      %v859 = vmax.f32 %v709, 0.0
      %v860 = vmax.f32 %v714, 0.0
      %v861 = vmax.f32 %v717, 0.0
      %v862 = vmax.f32 %v722, 0.0
      %v863 = vmax.f32 %v725, 0.0
      %v864 = vmax.f32 %v730, 0.0
      %v865 = vmax.f32 %v733, 0.0
      %v866 = vmax.f32 %v738, 0.0
      %v867 = vmax.f32 %v741, 0.0
      %v868 = vmax.f32 %v746, 0.0
      %v869 = vmax.f32 %v749, 0.0
      %v870 = vmax.f32 %v754, 0.0
      %v871 = vmax.f32 %v757, 0.0
      %v872 = vmax.f32 %v762, 0.0
      %v873 = vmax.f32 %v765, 0.0
      %v874 = vmax.f32 %v770, 0.0
      %v875 = vmax.f32 %v773, 0.0
      %v876 = vmax.f32 %v778, 0.0
      %v877 = vmax.f32 %v781, 0.0
      %v878 = vmax.f32 %v786, 0.0
      %v879 = vmax.f32 %v789, 0.0
      %v880 = vmax.f32 %v794, 0.0
      %v881 = vmax.f32 %v797, 0.0
      %v882 = vmax.f32 %v802, 0.0
      %v883 = vmax.f32 %v805, 0.0
      %v884 = vmax.f32 %v810, 0.0
      %v885 = vmax.f32 %v813, 0.0
      %v886 = vmax.f32 %v818, 0.0
      %v887 = vmax.f32 %v821, 0.0
      %vm888 = vcmask 130048
      %889 = vst.msk [vmem:[%s172] sm:$0xff] %vm888, %v824
      %890 = vst.msk [vmem:[%s172 + $0x8] sm:$0xff] %vm888, %v825
      %891 = vst.msk [vmem:[%s172 + $0x10] sm:$0xff] %vm888, %v826
      %892 = vst.msk [vmem:[%s172 + $0x18] sm:$0xff] %vm888, %v827
      %893 = vst.msk [vmem:[%s172 + $0x20] sm:$0xff] %vm888, %v828
      %894 = vst.msk [vmem:[%s172 + $0x28] sm:$0xff] %vm888, %v829
      %895 = vst.msk [vmem:[%s172 + $0x30] sm:$0xff] %vm888, %v830
      %896 = vst.msk [vmem:[%s172 + $0x38] sm:$0xff] %vm888, %v831
      %897 = vst.msk [vmem:[%s172 + $0x40] sm:$0xff] %vm888, %v832
      %898 = vst.msk [vmem:[%s172 + $0x48] sm:$0xff] %vm888, %v833
      %899 = vst.msk [vmem:[%s172 + $0x50] sm:$0xff] %vm888, %v834
      %900 = vst.msk [vmem:[%s172 + $0x58] sm:$0xff] %vm888, %v835
      %901 = vst.msk [vmem:[%s172 + $0x60] sm:$0xff] %vm888, %v836
      %902 = vst.msk [vmem:[%s172 + $0x68] sm:$0xff] %vm888, %v837
      %903 = vst.msk [vmem:[%s172 + $0x70] sm:$0xff] %vm888, %v838
      %904 = vst.msk [vmem:[%s172 + $0x78] sm:$0xff] %vm888, %v839
      %905 = vst.msk [vmem:[%s172 + $0x80] sm:$0xff] %vm888, %v840
      %906 = vst.msk [vmem:[%s172 + $0x88] sm:$0xff] %vm888, %v841
      %907 = vst.msk [vmem:[%s172 + $0x90] sm:$0xff] %vm888, %v842
      %908 = vst.msk [vmem:[%s172 + $0x98] sm:$0xff] %vm888, %v843
      %909 = vst.msk [vmem:[%s172 + $0xa0] sm:$0xff] %vm888, %v844
      %910 = vst.msk [vmem:[%s172 + $0xa8] sm:$0xff] %vm888, %v845
      %911 = vst.msk [vmem:[%s172 + $0xb0] sm:$0xff] %vm888, %v846
      %912 = vst.msk [vmem:[%s172 + $0xb8] sm:$0xff] %vm888, %v847
      %913 = vst.msk [vmem:[%s172 + $0xc0] sm:$0xff] %vm888, %v848
      %914 = vst.msk [vmem:[%s172 + $0xc8] sm:$0xff] %vm888, %v849
      %915 = vst.msk [vmem:[%s172 + $0xd0] sm:$0xff] %vm888, %v850
      %916 = vst.msk [vmem:[%s172 + $0xd8] sm:$0xff] %vm888, %v851
      %917 = vst.msk [vmem:[%s172 + $0xe0] sm:$0xff] %vm888, %v852
      %918 = vst.msk [vmem:[%s172 + $0xe8] sm:$0xff] %vm888, %v853
      %919 = vst.msk [vmem:[%s172 + $0xf0] sm:$0xff] %vm888, %v854
      %920 = vst.msk [vmem:[%s172 + $0xf8] sm:$0xff] %vm888, %v855
      %921 = vst.msk [vmem:[%s172 + $0x100] sm:$0xff] %vm888, %v856
      %922 = vst.msk [vmem:[%s172 + $0x108] sm:$0xff] %vm888, %v857
      %923 = vst.msk [vmem:[%s172 + $0x110] sm:$0xff] %vm888, %v858
      %924 = vst.msk [vmem:[%s172 + $0x118] sm:$0xff] %vm888, %v859
      %925 = vst.msk [vmem:[%s172 + $0x120] sm:$0xff] %vm888, %v860
      %926 = vst.msk [vmem:[%s172 + $0x128] sm:$0xff] %vm888, %v861
      %927 = vst.msk [vmem:[%s172 + $0x130] sm:$0xff] %vm888, %v862
      %928 = vst.msk [vmem:[%s172 + $0x138] sm:$0xff] %vm888, %v863
      %929 = vst.msk [vmem:[%s172 + $0x140] sm:$0xff] %vm888, %v864
      %930 = vst.msk [vmem:[%s172 + $0x148] sm:$0xff] %vm888, %v865
      %931 = vst.msk [vmem:[%s172 + $0x150] sm:$0xff] %vm888, %v866
      %932 = vst.msk [vmem:[%s172 + $0x158] sm:$0xff] %vm888, %v867
      %933 = vst.msk [vmem:[%s172 + $0x160] sm:$0xff] %vm888, %v868
      %934 = vst.msk [vmem:[%s172 + $0x168] sm:$0xff] %vm888, %v869
      %935 = vst.msk [vmem:[%s172 + $0x170] sm:$0xff] %vm888, %v870
      %936 = vst.msk [vmem:[%s172 + $0x178] sm:$0xff] %vm888, %v871
      %937 = vst.msk [vmem:[%s172 + $0x180] sm:$0xff] %vm888, %v872
      %938 = vst.msk [vmem:[%s172 + $0x188] sm:$0xff] %vm888, %v873
      %939 = vst.msk [vmem:[%s172 + $0x190] sm:$0xff] %vm888, %v874
      %940 = vst.msk [vmem:[%s172 + $0x198] sm:$0xff] %vm888, %v875
      %941 = vst.msk [vmem:[%s172 + $0x1a0] sm:$0xff] %vm888, %v876
      %942 = vst.msk [vmem:[%s172 + $0x1a8] sm:$0xff] %vm888, %v877
      %943 = vst.msk [vmem:[%s172 + $0x1b0] sm:$0xff] %vm888, %v878
      %944 = vst.msk [vmem:[%s172 + $0x1b8] sm:$0xff] %vm888, %v879
      %945 = vst.msk [vmem:[%s172 + $0x1c0] sm:$0xff] %vm888, %v880
      %946 = vst.msk [vmem:[%s172 + $0x1c8] sm:$0xff] %vm888, %v881
      %947 = vst.msk [vmem:[%s172 + $0x1d0] sm:$0xff] %vm888, %v882
      %948 = vst.msk [vmem:[%s172 + $0x1d8] sm:$0xff] %vm888, %v883
      %949 = vst.msk [vmem:[%s172 + $0x1e0] sm:$0xff] %vm888, %v884
      %950 = vst.msk [vmem:[%s172 + $0x1e8] sm:$0xff] %vm888, %v885
      %951 = vst.msk [vmem:[%s172 + $0x1f0] sm:$0xff] %vm888, %v886
      %952 = vst.msk [vmem:[%s172 + $0x1f8] sm:$0xff] %vm888, %v887
      %s953 = smul.u32 64, %s14
      %p954 = scmp.lt.s32.totalorder %s953, 127
      %s955 = scalar_select %p954, %s953, 127
      %s956 = smul.addr %s955, 8
      %s957 = scalar_lea.vmem %s3, %s956
      // Predicated region
      $region33: #{tpu_custom_call.1} parent=31 // pred_check
        %p958 = pneg %p100
      $region34: #{tpu_custom_call.1} parent=31 // pred_check_branch
        %960 = sbr.rel (%p958) target = $region36
      $region35: #{tpu_custom_call.1} parent=31 // pred_region
        %s961 = smul.u32 64, %s14
      $region36: #{tpu_custom_call.1} parent=31 // pred_fallthru
        _
    $region32: #{tpu_custom_call.1} parent=5 // pred_fallthru
      _
    %p962 = scmp.le.s32.totalorder 2, %s9
    // Predicated region
    $region37: #{tpu_custom_call.1} parent=5 // pred_check
      %p963 = pneg %p962
    $region38: #{tpu_custom_call.1} parent=5 // pred_check_branch
      %965 = sbr.rel (%p963) target = $region40
    $region39: #{tpu_custom_call.1} parent=5 // pred_region
      %s966 = ssub.s32 %s9, 2
      // Predicated region
      $region41: #{tpu_custom_call.1} parent=39 // pred_check
        %p967 = pneg %p106
      $region42: #{tpu_custom_call.1} parent=39 // pred_check_branch
        %969 = sbr.rel (%p967) target = $region44
      $region43: #{tpu_custom_call.1} parent=39 // pred_region
        %s970 = smul.u32 64, %s15
        %p971 = scmp.lt.s32.totalorder %s970, 127
        %s972 = scalar_select %p971, %s970, 127
        %s973 = smul.addr %s972, 8
        %s974 = scalar_lea.vmem %s3, %s973
      $region44: #{tpu_custom_call.1} parent=39 // pred_fallthru
        _
    $region40: #{tpu_custom_call.1} parent=5 // pred_fallthru
      _
  $region6: #{tpu_custom_call.1} parent=0 // loop_footer
    %s13 = sadd.s32 1, %s9
  $region7: #{tpu_custom_call.1} parent=0 // loop_footer_branch
    %8 = sbr.rel target = $region3
  $region8: #{tpu_custom_call.1} parent=0 // loop_exit
    _

</llo_original>
